<compile_context>
chip_gen: v5e
topology: v5e:2x2
jax: 0.10.0
libtpu: 0.0.40
codegen_flags: <defaults>
</compile_context>

<pallas_src>
import functools

import jax
import jax.numpy as jnp
from jax.experimental import pallas as pl
from jax.experimental.pallas import tpu as pltpu


_VMEM_LIMIT_BYTES = 48 * 1024 * 1024   # safe on v7x (64 MiB physical), ample on v5e/v6e
_VMEM_TILE_BUDGET = 40 * 1024 * 1024   # budget used to derive tile_rows (leaves headroom)
_MASKED_DIST = 1e30                     # exp(BIG/sigma)=inf -> sigmoid -> exactly 0


def _blend_kernel(colors_ref, frags_ref, out_ref, prob_scr, *,
                  inv_sigma, inv_gamma, inv_zrange, eps, zfar, background):
    # colors_ref: (3, K, TR, 128) bf16/f32  per-face shaded colors, channel-major
    # frags_ref : (2, K, TR, 128) f32       plane 0 = masked dists, plane 1 = masked zbuf
    # out_ref   : (4, TR, 128)    f32       RGBA, lane- and sublane-dense
    # prob_scr  : (K, TR, 128)    f32       VMEM scratch for per-face prob_map
    K = colors_ref.shape[1]
    shape = out_ref.shape[1:]

    alpha = jnp.ones(shape, jnp.float32)
    z_inv_max = jnp.zeros(shape, jnp.float32)

    # Pass 1: per-face prob_map (stashed), alpha product, z_inv max.
    for k in range(K):
        d = frags_ref[0, k]                                   # (TR, 128)
        prob = 1.0 / (1.0 + jnp.exp(d * inv_sigma))           # sigmoid(-d/sigma); masked -> 0
        prob_scr[k] = prob
        alpha = alpha * (1.0 - prob)
        z_inv = (zfar - frags_ref[1, k]) * inv_zrange         # masked zbuf == zfar -> 0
        z_inv_max = jnp.maximum(z_inv_max, z_inv)

    z_inv_max = jnp.maximum(z_inv_max, 1e-7)
    delta = jnp.maximum(jnp.exp((eps - z_inv_max) * inv_gamma), 1e-7)

    denom = delta
    acc0 = jnp.zeros(shape, jnp.float32)
    acc1 = jnp.zeros(shape, jnp.float32)
    acc2 = jnp.zeros(shape, jnp.float32)

    # Pass 2: form each weight once, consume it for denom + 3 channels in the same sweep.
    for k in range(K):
        z_inv = (zfar - frags_ref[1, k]) * inv_zrange         # cheap recompute (2 VPU ops)
        w = prob_scr[k] * jnp.exp((z_inv - z_inv_max) * inv_gamma)
        denom = denom + w
        acc0 = acc0 + w * colors_ref[0, k].astype(jnp.float32)
        acc1 = acc1 + w * colors_ref[1, k].astype(jnp.float32)
        acc2 = acc2 + w * colors_ref[2, k].astype(jnp.float32)

    inv_denom = 1.0 / denom                                   # one exact divide for 3 channels
    out_ref[0] = ((acc0 + delta * background[0]) * inv_denom).astype(out_ref.dtype)
    out_ref[1] = ((acc1 + delta * background[1]) * inv_denom).astype(out_ref.dtype)
    out_ref[2] = ((acc2 + delta * background[2]) * inv_denom).astype(out_ref.dtype)
    out_ref[3] = (1.0 - alpha).astype(out_ref.dtype)


def _derive_tile_rows(R, K, N, tile_rows, colors_itemsize):
    """Pick a sublane-aligned row tile that keeps the double-buffered working set in budget."""
    if tile_rows is None:
        # bytes per row of 128 pixels: 2x(colors + frags + out) + prob scratch
        bytes_per_row = 128 * (2 * (K * (3 * colors_itemsize + 2 * 4) + 4 * 4) + K * 4)
        tr = int(_VMEM_TILE_BUDGET // max(1, bytes_per_row))
        tr = max(8, min(512, tr))
    else:
        tr = int(tile_rows)
    # Keep >= 2 row tiles when N == 1 so a v7x 2-TC chip doesn't idle a core.
    if N == 1 and tr >= R and R >= 16:
        tr = -(-R // 2)
    tr = min(tr, R)
    if tr == R:                       # full-extent block (allowed even if not multiple of 8)
        return R
    tr = max(8, (tr // 8) * 8)        # sublane-aligned partial blocks
    return min(tr, R)


def softmax_rgb_blend_packed(colors_p, frags_p, *, sigma, gamma, background_color,
                             znear, zfar, eps, tile_rows=None):
    """Hot path. colors_p: (N,3,K,R,128); frags_p: (N,2,K,R,128) f32. Returns (N,4,R,128) f32."""
    N, C, K, R, L = colors_p.shape
    assert C == 3 and L == 128
    assert frags_p.shape == (N, 2, K, R, 128)

    tr = _derive_tile_rows(R, K, N, tile_rows, jnp.dtype(colors_p.dtype).itemsize)
    grid = (N, pl.cdiv(R, tr))

    kernel = functools.partial(
        _blend_kernel,
        inv_sigma=1.0 / float(sigma),
        inv_gamma=1.0 / float(gamma),
        inv_zrange=1.0 / (float(zfar) - float(znear)),
        eps=float(eps),
        zfar=float(zfar),
        background=tuple(float(b) for b in background_color),
    )

    return pl.pallas_call(
        kernel,
        out_shape=jax.ShapeDtypeStruct((N, 4, R, 128), jnp.float32),
        grid_spec=pltpu.PrefetchScalarGridSpec(
            num_scalar_prefetch=0,
            grid=grid,
            in_specs=[
                pl.BlockSpec((None, 3, K, tr, 128), lambda n, i: (n, 0, 0, i, 0)),
                pl.BlockSpec((None, 2, K, tr, 128), lambda n, i: (n, 0, 0, i, 0)),
            ],
            out_specs=pl.BlockSpec((None, 4, tr, 128), lambda n, i: (n, 0, i, 0)),
            scratch_shapes=[pltpu.VMEM((K, tr, 128), jnp.float32)],
        ),
        compiler_params=pltpu.CompilerParams(
            dimension_semantics=("parallel", "parallel"),
            vmem_limit_bytes=_VMEM_LIMIT_BYTES,
        ),
    )(colors_p, frags_p)


def _pack_inputs(colors, pix_to_face, zbuf, dists, *, zfar, colors_dtype):
    """Relayout NHWK(,C) -> (N,C,K,R,128) with pixels dense on (rows, lanes).

    The pix_to_face mask is folded here (masked dists -> +BIG, masked zbuf -> zfar) so the
    kernel needs no mask plane and frags shrinks to 2 planes.
    TODO(synk): emit this packed layout directly from the rasterizer/shader so the transpose
    fuses upstream instead of costing an extra HBM round trip.
    """
    N, H, W, K = pix_to_face.shape
    HW = H * W
    R = pl.cdiv(HW, 128)
    pad = R * 128 - HW

    def pack(x):  # (N, H, W, K, C) -> (N, C, K, R, 128)
        Cc = x.shape[-1]
        x = x.reshape(N, HW, K, Cc)
        x = jnp.transpose(x, (0, 3, 2, 1))              # (N, C, K, HW)
        if pad:
            x = jnp.pad(x, ((0, 0), (0, 0), (0, 0), (0, pad)))
        return x.reshape(N, Cc, K, R, 128)

    valid = pix_to_face >= 0
    dists_m = jnp.where(valid, dists.astype(jnp.float32), jnp.float32(_MASKED_DIST))
    zbuf_m = jnp.where(valid, zbuf.astype(jnp.float32), jnp.float32(zfar))
    frags_p = pack(jnp.stack([dists_m, zbuf_m], axis=-1))           # (N, 2, K, R, 128) f32
    colors_p = pack(colors.astype(colors_dtype))                    # (N, 3, K, R, 128)
    return colors_p, frags_p, HW, pad


def soft_phong_shader_plus_blend(colors, pix_to_face, zbuf, dists, *,
                                 sigma=1e-2, gamma=1e-2,
                                 background_color=(1.0, 1.0, 1.0),
                                 znear=1.0, zfar=100.0, eps=1e-10,
                                 tile_rows=None, colors_dtype=jnp.bfloat16):
    """softmax_rgb_blend_plus: colors (N,H,W,K,3), fragments (N,H,W,K) -> (N,4,H,W)."""
    N, H, W, K = pix_to_face.shape
    colors_p, frags_p, HW, pad = _pack_inputs(
        colors, pix_to_face, zbuf, dists, zfar=zfar, colors_dtype=colors_dtype)
    out = softmax_rgb_blend_packed(
        colors_p, frags_p,
        sigma=sigma, gamma=gamma, background_color=background_color,
        znear=znear, zfar=zfar, eps=eps, tile_rows=tile_rows)        # (N, 4, R, 128)
    if pad:
        out = out.reshape(N, 4, -1)[..., :HW]
    return out.reshape(N, 4, H, W)                                   # free reshape, no transpose


def _reference_blend(colors, pix_to_face, zbuf, dists, *, sigma, gamma,
                     background_color, znear, zfar, eps):
    """Pure-JAX port of softmax_rgb_blend_plus (mirrors the torch code) for checking."""
    mask = (pix_to_face >= 0).astype(jnp.float32)                        # (N,H,W,K)
    prob_map = jax.nn.sigmoid(-dists / sigma) * mask
    alpha = jnp.prod(1.0 - prob_map, axis=-1)                            # (N,H,W)
    z_inv = (zfar - zbuf) / (zfar - znear) * mask
    z_inv_max = jnp.maximum(jnp.max(z_inv, axis=-1, keepdims=True), 1e-7)
    weights_num = prob_map * jnp.exp((z_inv - z_inv_max) / gamma)
    delta = jnp.maximum(jnp.exp((eps - z_inv_max) / gamma), 1e-7)        # (N,H,W,1)
    denom = jnp.sum(weights_num, axis=-1, keepdims=True) + delta
    weighted_colors = jnp.sum(weights_num[..., None] * colors, axis=-2)  # (N,H,W,3)
    bg = jnp.asarray(background_color, dtype=jnp.float32)
    rgb = (weighted_colors + delta * bg) / denom
    out = jnp.concatenate([rgb, (1.0 - alpha)[..., None]], axis=-1)      # (N,H,W,4)
    return jnp.transpose(out, (0, 3, 1, 2))                              # (N,4,H,W)


if __name__ == "__main__":
    key = jax.random.PRNGKey(0)
    N, H, W, K = 2, 16, 16, 4

    k1, k2, k3, k4 = jax.random.split(key, 4)
    # Per-pixel per-face shaded colors (stand-in for phong_shading output).
    colors = jax.random.uniform(k1, (N, H, W, K, 3), dtype=jnp.float32)
    # pix_to_face: some valid face ids, some -1 (background).
    pix_to_face = jax.random.randint(k2, (N, H, W, K), minval=-1, maxval=50).astype(jnp.int32)
    # zbuf in [znear, zfar], dists signed (negative inside a face in pytorch3d).
    zbuf = jax.random.uniform(k3, (N, H, W, K), minval=1.0, maxval=100.0, dtype=jnp.float32)
    dists = jax.random.normal(k4, (N, H, W, K), dtype=jnp.float32) * 1e-2

    blend_kwargs = dict(sigma=1e-2, gamma=1e-2, background_color=(1.0, 1.0, 1.0),
                        znear=1.0, zfar=100.0, eps=1e-10)

    blend = jax.jit(functools.partial(soft_phong_shader_plus_blend, **blend_kwargs))
    out = blend(colors, pix_to_face, zbuf, dists)
    out = jax.block_until_ready(out)
    assert out.shape == (N, 4, H, W)

    # Tight check vs reference run at the kernel's color precision (bf16-rounded colors);
    # tolerance relaxed to 1e-4 to cover reciprocal-multiply vs divide rounding.
    colors_q = colors.astype(jnp.bfloat16).astype(jnp.float32)
    ref_q = _reference_blend(colors_q, pix_to_face, zbuf, dists, **blend_kwargs)
    assert jnp.allclose(out, ref_q, rtol=1e-4, atol=1e-4), "mismatch vs bf16-color reference"

    # Loose check vs the full-f32 reference (bounds the bf16 color-traffic optimization).
    ref_f32 = _reference_blend(colors, pix_to_face, zbuf, dists, **blend_kwargs)
    assert jnp.allclose(out, ref_f32, rtol=0.0, atol=1e-2), "mismatch vs f32 reference"

    print("KERNEL_OK")
</pallas_src>

<mosaic_0001>
module attributes {stable_mosaic.version = 11 : i64} {
  func.func @_blend_kernel(%arg0: i32, %arg1: i32, %arg2: memref<1x3x4x2x128xbf16, #tpu.memory_space<vmem>>, %arg3: memref<1x2x4x2x128xf32, #tpu.memory_space<vmem>>, %arg4: memref<1x4x2x128xf32, #tpu.memory_space<vmem>>, %arg5: memref<4x2x128xf32, #tpu.memory_space<vmem>>) attributes {dimension_semantics = [#tpu.dimension_semantics<parallel>, #tpu.dimension_semantics<parallel>], iteration_bounds = array<i64: 2, 1>, scalar_prefetch = 0 : i64, scratch_operands = 1 : i64, tpu.core_type = #tpu.core_type<tc>, window_params = [{transform_indices = @transform_0, window_bounds = array<i64: 1, 3, 4, 2, 128>}, {transform_indices = @transform_1, window_bounds = array<i64: 1, 2, 4, 2, 128>}, {transform_indices = @transform_2, window_bounds = array<i64: 1, 4, 2, 128>}]} {
    %cst = arith.constant 1.000000e+00 : f32
    %0 = vector.broadcast %cst : f32 to vector<2x128xf32>
    %cst_0 = arith.constant 0.000000e+00 : f32
    %1 = vector.broadcast %cst_0 : f32 to vector<2x128xf32>
    %c0 = arith.constant 0 : index
    %c0_1 = arith.constant 0 : index
    %c0_2 = arith.constant 0 : index
    %c0_3 = arith.constant 0 : index
    %c0_4 = arith.constant 0 : index
    %2 = vector.load %arg3[%c0, %c0_1, %c0_2, %c0_3, %c0_4] : memref<1x2x4x2x128xf32, #tpu.memory_space<vmem>>, vector<1x1x1x2x128xf32>
    %3 = vector.shape_cast %2 : vector<1x1x1x2x128xf32> to vector<2x128xf32>
    %cst_5 = arith.constant 1.000000e+02 : f32
    %4 = vector.broadcast %cst_5 : f32 to vector<2x128xf32>
    %5 = arith.mulf %3, %4 : vector<2x128xf32>
    %6 = math.exp %5 : vector<2x128xf32>
    %cst_6 = arith.constant 1.000000e+00 : f32
    %7 = vector.broadcast %cst_6 : f32 to vector<2x128xf32>
    %8 = arith.addf %7, %6 : vector<2x128xf32>
    %cst_7 = arith.constant 1.000000e+00 : f32
    %9 = vector.broadcast %cst_7 : f32 to vector<2x128xf32>
    %10 = arith.divf %9, %8 : vector<2x128xf32>
    %c0_8 = arith.constant 0 : index
    %c0_9 = arith.constant 0 : index
    %c0_10 = arith.constant 0 : index
    %11 = vector.load %arg5[%c0_8, %c0_9, %c0_10] : memref<4x2x128xf32, #tpu.memory_space<vmem>>, vector<1x2x128xf32>
    %12 = vector.shape_cast %11 : vector<1x2x128xf32> to vector<2x128xf32>
    %13 = vector.shape_cast %10 : vector<2x128xf32> to vector<1x2x128xf32>
    tpu.vector_store %arg5[%c0_8, %c0_9, %c0_10], %13 {strides = array<i32>} : memref<4x2x128xf32, #tpu.memory_space<vmem>>, vector<1x2x128xf32>,
    %cst_11 = arith.constant 1.000000e+00 : f32
    %14 = vector.broadcast %cst_11 : f32 to vector<2x128xf32>
    %15 = arith.subf %14, %10 : vector<2x128xf32>
    %16 = arith.mulf %0, %15 : vector<2x128xf32>
    %c0_12 = arith.constant 0 : index
    %c1 = arith.constant 1 : index
    %c0_13 = arith.constant 0 : index
    %c0_14 = arith.constant 0 : index
    %c0_15 = arith.constant 0 : index
    %17 = vector.load %arg3[%c0_12, %c1, %c0_13, %c0_14, %c0_15] : memref<1x2x4x2x128xf32, #tpu.memory_space<vmem>>, vector<1x1x1x2x128xf32>
    %18 = vector.shape_cast %17 : vector<1x1x1x2x128xf32> to vector<2x128xf32>
    %cst_16 = arith.constant 1.000000e+02 : f32
    %19 = vector.broadcast %cst_16 : f32 to vector<2x128xf32>
    %20 = arith.subf %19, %18 : vector<2x128xf32>
    %cst_17 = arith.constant 0.0101010101 : f32
    %21 = vector.broadcast %cst_17 : f32 to vector<2x128xf32>
    %22 = arith.mulf %20, %21 : vector<2x128xf32>
    %23 = arith.maximumf %1, %22 : vector<2x128xf32>
    %c0_18 = arith.constant 0 : index
    %c0_19 = arith.constant 0 : index
    %c1_20 = arith.constant 1 : index
    %c0_21 = arith.constant 0 : index
    %c0_22 = arith.constant 0 : index
    %24 = vector.load %arg3[%c0_18, %c0_19, %c1_20, %c0_21, %c0_22] : memref<1x2x4x2x128xf32, #tpu.memory_space<vmem>>, vector<1x1x1x2x128xf32>
    %25 = vector.shape_cast %24 : vector<1x1x1x2x128xf32> to vector<2x128xf32>
    %cst_23 = arith.constant 1.000000e+02 : f32
    %26 = vector.broadcast %cst_23 : f32 to vector<2x128xf32>
    %27 = arith.mulf %25, %26 : vector<2x128xf32>
    %28 = math.exp %27 : vector<2x128xf32>
    %cst_24 = arith.constant 1.000000e+00 : f32
    %29 = vector.broadcast %cst_24 : f32 to vector<2x128xf32>
    %30 = arith.addf %29, %28 : vector<2x128xf32>
    %cst_25 = arith.constant 1.000000e+00 : f32
    %31 = vector.broadcast %cst_25 : f32 to vector<2x128xf32>
    %32 = arith.divf %31, %30 : vector<2x128xf32>
    %c1_26 = arith.constant 1 : index
    %c0_27 = arith.constant 0 : index
    %c0_28 = arith.constant 0 : index
    %33 = vector.load %arg5[%c1_26, %c0_27, %c0_28] : memref<4x2x128xf32, #tpu.memory_space<vmem>>, vector<1x2x128xf32>
    %34 = vector.shape_cast %33 : vector<1x2x128xf32> to vector<2x128xf32>
    %35 = vector.shape_cast %32 : vector<2x128xf32> to vector<1x2x128xf32>
    tpu.vector_store %arg5[%c1_26, %c0_27, %c0_28], %35 {strides = array<i32>} : memref<4x2x128xf32, #tpu.memory_space<vmem>>, vector<1x2x128xf32>,
    %cst_29 = arith.constant 1.000000e+00 : f32
    %36 = vector.broadcast %cst_29 : f32 to vector<2x128xf32>
    %37 = arith.subf %36, %32 : vector<2x128xf32>
    %38 = arith.mulf %16, %37 : vector<2x128xf32>
    %c0_30 = arith.constant 0 : index
    %c1_31 = arith.constant 1 : index
    %c1_32 = arith.constant 1 : index
    %c0_33 = arith.constant 0 : index
    %c0_34 = arith.constant 0 : index
    %39 = vector.load %arg3[%c0_30, %c1_31, %c1_32, %c0_33, %c0_34] : memref<1x2x4x2x128xf32, #tpu.memory_space<vmem>>, vector<1x1x1x2x128xf32>
    %40 = vector.shape_cast %39 : vector<1x1x1x2x128xf32> to vector<2x128xf32>
    %cst_35 = arith.constant 1.000000e+02 : f32
    %41 = vector.broadcast %cst_35 : f32 to vector<2x128xf32>
    %42 = arith.subf %41, %40 : vector<2x128xf32>
    %cst_36 = arith.constant 0.0101010101 : f32
    %43 = vector.broadcast %cst_36 : f32 to vector<2x128xf32>
    %44 = arith.mulf %42, %43 : vector<2x128xf32>
    %45 = arith.maximumf %23, %44 : vector<2x128xf32>
    %c0_37 = arith.constant 0 : index
    %c0_38 = arith.constant 0 : index
    %c2 = arith.constant 2 : index
    %c0_39 = arith.constant 0 : index
    %c0_40 = arith.constant 0 : index
    %46 = vector.load %arg3[%c0_37, %c0_38, %c2, %c0_39, %c0_40] : memref<1x2x4x2x128xf32, #tpu.memory_space<vmem>>, vector<1x1x1x2x128xf32>
    %47 = vector.shape_cast %46 : vector<1x1x1x2x128xf32> to vector<2x128xf32>
    %cst_41 = arith.constant 1.000000e+02 : f32
    %48 = vector.broadcast %cst_41 : f32 to vector<2x128xf32>
    %49 = arith.mulf %47, %48 : vector<2x128xf32>
    %50 = math.exp %49 : vector<2x128xf32>
    %cst_42 = arith.constant 1.000000e+00 : f32
    %51 = vector.broadcast %cst_42 : f32 to vector<2x128xf32>
    %52 = arith.addf %51, %50 : vector<2x128xf32>
    %cst_43 = arith.constant 1.000000e+00 : f32
    %53 = vector.broadcast %cst_43 : f32 to vector<2x128xf32>
    %54 = arith.divf %53, %52 : vector<2x128xf32>
    %c2_44 = arith.constant 2 : index
    %c0_45 = arith.constant 0 : index
    %c0_46 = arith.constant 0 : index
    %55 = vector.load %arg5[%c2_44, %c0_45, %c0_46] : memref<4x2x128xf32, #tpu.memory_space<vmem>>, vector<1x2x128xf32>
    %56 = vector.shape_cast %55 : vector<1x2x128xf32> to vector<2x128xf32>
    %57 = vector.shape_cast %54 : vector<2x128xf32> to vector<1x2x128xf32>
    tpu.vector_store %arg5[%c2_44, %c0_45, %c0_46], %57 {strides = array<i32>} : memref<4x2x128xf32, #tpu.memory_space<vmem>>, vector<1x2x128xf32>,
    %cst_47 = arith.constant 1.000000e+00 : f32
    %58 = vector.broadcast %cst_47 : f32 to vector<2x128xf32>
    %59 = arith.subf %58, %54 : vector<2x128xf32>
    %60 = arith.mulf %38, %59 : vector<2x128xf32>
    %c0_48 = arith.constant 0 : index
    %c1_49 = arith.constant 1 : index
    %c2_50 = arith.constant 2 : index
    %c0_51 = arith.constant 0 : index
    %c0_52 = arith.constant 0 : index
    %61 = vector.load %arg3[%c0_48, %c1_49, %c2_50, %c0_51, %c0_52] : memref<1x2x4x2x128xf32, #tpu.memory_space<vmem>>, vector<1x1x1x2x128xf32>
    %62 = vector.shape_cast %61 : vector<1x1x1x2x128xf32> to vector<2x128xf32>
    %cst_53 = arith.constant 1.000000e+02 : f32
    %63 = vector.broadcast %cst_53 : f32 to vector<2x128xf32>
    %64 = arith.subf %63, %62 : vector<2x128xf32>
    %cst_54 = arith.constant 0.0101010101 : f32
    %65 = vector.broadcast %cst_54 : f32 to vector<2x128xf32>
    %66 = arith.mulf %64, %65 : vector<2x128xf32>
    %67 = arith.maximumf %45, %66 : vector<2x128xf32>
    %c0_55 = arith.constant 0 : index
    %c0_56 = arith.constant 0 : index
    %c3 = arith.constant 3 : index
    %c0_57 = arith.constant 0 : index
    %c0_58 = arith.constant 0 : index
    %68 = vector.load %arg3[%c0_55, %c0_56, %c3, %c0_57, %c0_58] : memref<1x2x4x2x128xf32, #tpu.memory_space<vmem>>, vector<1x1x1x2x128xf32>
    %69 = vector.shape_cast %68 : vector<1x1x1x2x128xf32> to vector<2x128xf32>
    %cst_59 = arith.constant 1.000000e+02 : f32
    %70 = vector.broadcast %cst_59 : f32 to vector<2x128xf32>
    %71 = arith.mulf %69, %70 : vector<2x128xf32>
    %72 = math.exp %71 : vector<2x128xf32>
    %cst_60 = arith.constant 1.000000e+00 : f32
    %73 = vector.broadcast %cst_60 : f32 to vector<2x128xf32>
    %74 = arith.addf %73, %72 : vector<2x128xf32>
    %cst_61 = arith.constant 1.000000e+00 : f32
    %75 = vector.broadcast %cst_61 : f32 to vector<2x128xf32>
    %76 = arith.divf %75, %74 : vector<2x128xf32>
    %c3_62 = arith.constant 3 : index
    %c0_63 = arith.constant 0 : index
    %c0_64 = arith.constant 0 : index
    %77 = vector.load %arg5[%c3_62, %c0_63, %c0_64] : memref<4x2x128xf32, #tpu.memory_space<vmem>>, vector<1x2x128xf32>
    %78 = vector.shape_cast %77 : vector<1x2x128xf32> to vector<2x128xf32>
    %79 = vector.shape_cast %76 : vector<2x128xf32> to vector<1x2x128xf32>
    tpu.vector_store %arg5[%c3_62, %c0_63, %c0_64], %79 {strides = array<i32>} : memref<4x2x128xf32, #tpu.memory_space<vmem>>, vector<1x2x128xf32>,
    %cst_65 = arith.constant 1.000000e+00 : f32
    %80 = vector.broadcast %cst_65 : f32 to vector<2x128xf32>
    %81 = arith.subf %80, %76 : vector<2x128xf32>
    %82 = arith.mulf %60, %81 : vector<2x128xf32>
    %c0_66 = arith.constant 0 : index
    %c1_67 = arith.constant 1 : index
    %c3_68 = arith.constant 3 : index
    %c0_69 = arith.constant 0 : index
    %c0_70 = arith.constant 0 : index
    %83 = vector.load %arg3[%c0_66, %c1_67, %c3_68, %c0_69, %c0_70] : memref<1x2x4x2x128xf32, #tpu.memory_space<vmem>>, vector<1x1x1x2x128xf32>
    %84 = vector.shape_cast %83 : vector<1x1x1x2x128xf32> to vector<2x128xf32>
    %cst_71 = arith.constant 1.000000e+02 : f32
    %85 = vector.broadcast %cst_71 : f32 to vector<2x128xf32>
    %86 = arith.subf %85, %84 : vector<2x128xf32>
    %cst_72 = arith.constant 0.0101010101 : f32
    %87 = vector.broadcast %cst_72 : f32 to vector<2x128xf32>
    %88 = arith.mulf %86, %87 : vector<2x128xf32>
    %89 = arith.maximumf %67, %88 : vector<2x128xf32>
    %cst_73 = arith.constant 1.000000e-07 : f32
    %90 = vector.broadcast %cst_73 : f32 to vector<2x128xf32>
    %91 = arith.maximumf %89, %90 : vector<2x128xf32>
    %cst_74 = arith.constant 1.000000e-10 : f32
    %92 = vector.broadcast %cst_74 : f32 to vector<2x128xf32>
    %93 = arith.subf %92, %91 : vector<2x128xf32>
    %cst_75 = arith.constant 1.000000e+02 : f32
    %94 = vector.broadcast %cst_75 : f32 to vector<2x128xf32>
    %95 = arith.mulf %93, %94 : vector<2x128xf32>
    %96 = math.exp %95 : vector<2x128xf32>
    %cst_76 = arith.constant 1.000000e-07 : f32
    %97 = vector.broadcast %cst_76 : f32 to vector<2x128xf32>
    %98 = arith.maximumf %96, %97 : vector<2x128xf32>
    %cst_77 = arith.constant 0.000000e+00 : f32
    %99 = vector.broadcast %cst_77 : f32 to vector<2x128xf32>
    %cst_78 = arith.constant 0.000000e+00 : f32
    %100 = vector.broadcast %cst_78 : f32 to vector<2x128xf32>
    %cst_79 = arith.constant 0.000000e+00 : f32
    %101 = vector.broadcast %cst_79 : f32 to vector<2x128xf32>
    %c0_80 = arith.constant 0 : index
    %c1_81 = arith.constant 1 : index
    %c0_82 = arith.constant 0 : index
    %c0_83 = arith.constant 0 : index
    %c0_84 = arith.constant 0 : index
    %102 = vector.load %arg3[%c0_80, %c1_81, %c0_82, %c0_83, %c0_84] : memref<1x2x4x2x128xf32, #tpu.memory_space<vmem>>, vector<1x1x1x2x128xf32>
    %103 = vector.shape_cast %102 : vector<1x1x1x2x128xf32> to vector<2x128xf32>
    %cst_85 = arith.constant 1.000000e+02 : f32
    %104 = vector.broadcast %cst_85 : f32 to vector<2x128xf32>
    %105 = arith.subf %104, %103 : vector<2x128xf32>
    %cst_86 = arith.constant 0.0101010101 : f32
    %106 = vector.broadcast %cst_86 : f32 to vector<2x128xf32>
    %107 = arith.mulf %105, %106 : vector<2x128xf32>
    %c0_87 = arith.constant 0 : index
    %c0_88 = arith.constant 0 : index
    %c0_89 = arith.constant 0 : index
    %108 = vector.load %arg5[%c0_87, %c0_88, %c0_89] : memref<4x2x128xf32, #tpu.memory_space<vmem>>, vector<1x2x128xf32>
    %109 = vector.shape_cast %108 : vector<1x2x128xf32> to vector<2x128xf32>
    %110 = arith.subf %107, %91 : vector<2x128xf32>
    %cst_90 = arith.constant 1.000000e+02 : f32
    %111 = vector.broadcast %cst_90 : f32 to vector<2x128xf32>
    %112 = arith.mulf %110, %111 : vector<2x128xf32>
    %113 = math.exp %112 : vector<2x128xf32>
    %114 = arith.mulf %109, %113 : vector<2x128xf32>
    %115 = arith.addf %98, %114 : vector<2x128xf32>
    %c0_91 = arith.constant 0 : index
    %c0_92 = arith.constant 0 : index
    %c0_93 = arith.constant 0 : index
    %c0_94 = arith.constant 0 : index
    %c0_95 = arith.constant 0 : index
    %116 = vector.load %arg2[%c0_91, %c0_92, %c0_93, %c0_94, %c0_95] : memref<1x3x4x2x128xbf16, #tpu.memory_space<vmem>>, vector<1x1x1x2x128xbf16>
    %117 = vector.shape_cast %116 : vector<1x1x1x2x128xbf16> to vector<2x128xbf16>
    %118 = arith.extf %117 : vector<2x128xbf16> to vector<2x128xf32>
    %119 = arith.mulf %114, %118 : vector<2x128xf32>
    %120 = arith.addf %99, %119 : vector<2x128xf32>
    %c0_96 = arith.constant 0 : index
    %c1_97 = arith.constant 1 : index
    %c0_98 = arith.constant 0 : index
    %c0_99 = arith.constant 0 : index
    %c0_100 = arith.constant 0 : index
    %121 = vector.load %arg2[%c0_96, %c1_97, %c0_98, %c0_99, %c0_100] : memref<1x3x4x2x128xbf16, #tpu.memory_space<vmem>>, vector<1x1x1x2x128xbf16>
    %122 = vector.shape_cast %121 : vector<1x1x1x2x128xbf16> to vector<2x128xbf16>
    %123 = arith.extf %122 : vector<2x128xbf16> to vector<2x128xf32>
    %124 = arith.mulf %114, %123 : vector<2x128xf32>
    %125 = arith.addf %100, %124 : vector<2x128xf32>
    %c0_101 = arith.constant 0 : index
    %c2_102 = arith.constant 2 : index
    %c0_103 = arith.constant 0 : index
    %c0_104 = arith.constant 0 : index
    %c0_105 = arith.constant 0 : index
    %126 = vector.load %arg2[%c0_101, %c2_102, %c0_103, %c0_104, %c0_105] : memref<1x3x4x2x128xbf16, #tpu.memory_space<vmem>>, vector<1x1x1x2x128xbf16>
    %127 = vector.shape_cast %126 : vector<1x1x1x2x128xbf16> to vector<2x128xbf16>
    %128 = arith.extf %127 : vector<2x128xbf16> to vector<2x128xf32>
    %129 = arith.mulf %114, %128 : vector<2x128xf32>
    %130 = arith.addf %101, %129 : vector<2x128xf32>
    %c0_106 = arith.constant 0 : index
    %c1_107 = arith.constant 1 : index
    %c1_108 = arith.constant 1 : index
    %c0_109 = arith.constant 0 : index
    %c0_110 = arith.constant 0 : index
    %131 = vector.load %arg3[%c0_106, %c1_107, %c1_108, %c0_109, %c0_110] : memref<1x2x4x2x128xf32, #tpu.memory_space<vmem>>, vector<1x1x1x2x128xf32>
    %132 = vector.shape_cast %131 : vector<1x1x1x2x128xf32> to vector<2x128xf32>
    %cst_111 = arith.constant 1.000000e+02 : f32
    %133 = vector.broadcast %cst_111 : f32 to vector<2x128xf32>
    %134 = arith.subf %133, %132 : vector<2x128xf32>
    %cst_112 = arith.constant 0.0101010101 : f32
    %135 = vector.broadcast %cst_112 : f32 to vector<2x128xf32>
    %136 = arith.mulf %134, %135 : vector<2x128xf32>
    %c1_113 = arith.constant 1 : index
    %c0_114 = arith.constant 0 : index
    %c0_115 = arith.constant 0 : index
    %137 = vector.load %arg5[%c1_113, %c0_114, %c0_115] : memref<4x2x128xf32, #tpu.memory_space<vmem>>, vector<1x2x128xf32>
    %138 = vector.shape_cast %137 : vector<1x2x128xf32> to vector<2x128xf32>
    %139 = arith.subf %136, %91 : vector<2x128xf32>
    %cst_116 = arith.constant 1.000000e+02 : f32
    %140 = vector.broadcast %cst_116 : f32 to vector<2x128xf32>
    %141 = arith.mulf %139, %140 : vector<2x128xf32>
    %142 = math.exp %141 : vector<2x128xf32>
    %143 = arith.mulf %138, %142 : vector<2x128xf32>
    %144 = arith.addf %115, %143 : vector<2x128xf32>
    %c0_117 = arith.constant 0 : index
    %c0_118 = arith.constant 0 : index
    %c1_119 = arith.constant 1 : index
    %c0_120 = arith.constant 0 : index
    %c0_121 = arith.constant 0 : index
    %145 = vector.load %arg2[%c0_117, %c0_118, %c1_119, %c0_120, %c0_121] : memref<1x3x4x2x128xbf16, #tpu.memory_space<vmem>>, vector<1x1x1x2x128xbf16>
    %146 = vector.shape_cast %145 : vector<1x1x1x2x128xbf16> to vector<2x128xbf16>
    %147 = arith.extf %146 : vector<2x128xbf16> to vector<2x128xf32>
    %148 = arith.mulf %143, %147 : vector<2x128xf32>
    %149 = arith.addf %120, %148 : vector<2x128xf32>
    %c0_122 = arith.constant 0 : index
    %c1_123 = arith.constant 1 : index
    %c1_124 = arith.constant 1 : index
    %c0_125 = arith.constant 0 : index
    %c0_126 = arith.constant 0 : index
    %150 = vector.load %arg2[%c0_122, %c1_123, %c1_124, %c0_125, %c0_126] : memref<1x3x4x2x128xbf16, #tpu.memory_space<vmem>>, vector<1x1x1x2x128xbf16>
    %151 = vector.shape_cast %150 : vector<1x1x1x2x128xbf16> to vector<2x128xbf16>
    %152 = arith.extf %151 : vector<2x128xbf16> to vector<2x128xf32>
    %153 = arith.mulf %143, %152 : vector<2x128xf32>
    %154 = arith.addf %125, %153 : vector<2x128xf32>
    %c0_127 = arith.constant 0 : index
    %c2_128 = arith.constant 2 : index
    %c1_129 = arith.constant 1 : index
    %c0_130 = arith.constant 0 : index
    %c0_131 = arith.constant 0 : index
    %155 = vector.load %arg2[%c0_127, %c2_128, %c1_129, %c0_130, %c0_131] : memref<1x3x4x2x128xbf16, #tpu.memory_space<vmem>>, vector<1x1x1x2x128xbf16>
    %156 = vector.shape_cast %155 : vector<1x1x1x2x128xbf16> to vector<2x128xbf16>
    %157 = arith.extf %156 : vector<2x128xbf16> to vector<2x128xf32>
    %158 = arith.mulf %143, %157 : vector<2x128xf32>
    %159 = arith.addf %130, %158 : vector<2x128xf32>
    %c0_132 = arith.constant 0 : index
    %c1_133 = arith.constant 1 : index
    %c2_134 = arith.constant 2 : index
    %c0_135 = arith.constant 0 : index
    %c0_136 = arith.constant 0 : index
    %160 = vector.load %arg3[%c0_132, %c1_133, %c2_134, %c0_135, %c0_136] : memref<1x2x4x2x128xf32, #tpu.memory_space<vmem>>, vector<1x1x1x2x128xf32>
    %161 = vector.shape_cast %160 : vector<1x1x1x2x128xf32> to vector<2x128xf32>
    %cst_137 = arith.constant 1.000000e+02 : f32
    %162 = vector.broadcast %cst_137 : f32 to vector<2x128xf32>
    %163 = arith.subf %162, %161 : vector<2x128xf32>
    %cst_138 = arith.constant 0.0101010101 : f32
    %164 = vector.broadcast %cst_138 : f32 to vector<2x128xf32>
    %165 = arith.mulf %163, %164 : vector<2x128xf32>
    %c2_139 = arith.constant 2 : index
    %c0_140 = arith.constant 0 : index
    %c0_141 = arith.constant 0 : index
    %166 = vector.load %arg5[%c2_139, %c0_140, %c0_141] : memref<4x2x128xf32, #tpu.memory_space<vmem>>, vector<1x2x128xf32>
    %167 = vector.shape_cast %166 : vector<1x2x128xf32> to vector<2x128xf32>
    %168 = arith.subf %165, %91 : vector<2x128xf32>
    %cst_142 = arith.constant 1.000000e+02 : f32
    %169 = vector.broadcast %cst_142 : f32 to vector<2x128xf32>
    %170 = arith.mulf %168, %169 : vector<2x128xf32>
    %171 = math.exp %170 : vector<2x128xf32>
    %172 = arith.mulf %167, %171 : vector<2x128xf32>
    %173 = arith.addf %144, %172 : vector<2x128xf32>
    %c0_143 = arith.constant 0 : index
    %c0_144 = arith.constant 0 : index
    %c2_145 = arith.constant 2 : index
    %c0_146 = arith.constant 0 : index
    %c0_147 = arith.constant 0 : index
    %174 = vector.load %arg2[%c0_143, %c0_144, %c2_145, %c0_146, %c0_147] : memref<1x3x4x2x128xbf16, #tpu.memory_space<vmem>>, vector<1x1x1x2x128xbf16>
    %175 = vector.shape_cast %174 : vector<1x1x1x2x128xbf16> to vector<2x128xbf16>
    %176 = arith.extf %175 : vector<2x128xbf16> to vector<2x128xf32>
    %177 = arith.mulf %172, %176 : vector<2x128xf32>
    %178 = arith.addf %149, %177 : vector<2x128xf32>
    %c0_148 = arith.constant 0 : index
    %c1_149 = arith.constant 1 : index
    %c2_150 = arith.constant 2 : index
    %c0_151 = arith.constant 0 : index
    %c0_152 = arith.constant 0 : index
    %179 = vector.load %arg2[%c0_148, %c1_149, %c2_150, %c0_151, %c0_152] : memref<1x3x4x2x128xbf16, #tpu.memory_space<vmem>>, vector<1x1x1x2x128xbf16>
    %180 = vector.shape_cast %179 : vector<1x1x1x2x128xbf16> to vector<2x128xbf16>
    %181 = arith.extf %180 : vector<2x128xbf16> to vector<2x128xf32>
    %182 = arith.mulf %172, %181 : vector<2x128xf32>
    %183 = arith.addf %154, %182 : vector<2x128xf32>
    %c0_153 = arith.constant 0 : index
    %c2_154 = arith.constant 2 : index
    %c2_155 = arith.constant 2 : index
    %c0_156 = arith.constant 0 : index
    %c0_157 = arith.constant 0 : index
    %184 = vector.load %arg2[%c0_153, %c2_154, %c2_155, %c0_156, %c0_157] : memref<1x3x4x2x128xbf16, #tpu.memory_space<vmem>>, vector<1x1x1x2x128xbf16>
    %185 = vector.shape_cast %184 : vector<1x1x1x2x128xbf16> to vector<2x128xbf16>
    %186 = arith.extf %185 : vector<2x128xbf16> to vector<2x128xf32>
    %187 = arith.mulf %172, %186 : vector<2x128xf32>
    %188 = arith.addf %159, %187 : vector<2x128xf32>
    %c0_158 = arith.constant 0 : index
    %c1_159 = arith.constant 1 : index
    %c3_160 = arith.constant 3 : index
    %c0_161 = arith.constant 0 : index
    %c0_162 = arith.constant 0 : index
    %189 = vector.load %arg3[%c0_158, %c1_159, %c3_160, %c0_161, %c0_162] : memref<1x2x4x2x128xf32, #tpu.memory_space<vmem>>, vector<1x1x1x2x128xf32>
    %190 = vector.shape_cast %189 : vector<1x1x1x2x128xf32> to vector<2x128xf32>
    %cst_163 = arith.constant 1.000000e+02 : f32
    %191 = vector.broadcast %cst_163 : f32 to vector<2x128xf32>
    %192 = arith.subf %191, %190 : vector<2x128xf32>
    %cst_164 = arith.constant 0.0101010101 : f32
    %193 = vector.broadcast %cst_164 : f32 to vector<2x128xf32>
    %194 = arith.mulf %192, %193 : vector<2x128xf32>
    %c3_165 = arith.constant 3 : index
    %c0_166 = arith.constant 0 : index
    %c0_167 = arith.constant 0 : index
    %195 = vector.load %arg5[%c3_165, %c0_166, %c0_167] : memref<4x2x128xf32, #tpu.memory_space<vmem>>, vector<1x2x128xf32>
    %196 = vector.shape_cast %195 : vector<1x2x128xf32> to vector<2x128xf32>
    %197 = arith.subf %194, %91 : vector<2x128xf32>
    %cst_168 = arith.constant 1.000000e+02 : f32
    %198 = vector.broadcast %cst_168 : f32 to vector<2x128xf32>
    %199 = arith.mulf %197, %198 : vector<2x128xf32>
    %200 = math.exp %199 : vector<2x128xf32>
    %201 = arith.mulf %196, %200 : vector<2x128xf32>
    %202 = arith.addf %173, %201 : vector<2x128xf32>
    %c0_169 = arith.constant 0 : index
    %c0_170 = arith.constant 0 : index
    %c3_171 = arith.constant 3 : index
    %c0_172 = arith.constant 0 : index
    %c0_173 = arith.constant 0 : index
    %203 = vector.load %arg2[%c0_169, %c0_170, %c3_171, %c0_172, %c0_173] : memref<1x3x4x2x128xbf16, #tpu.memory_space<vmem>>, vector<1x1x1x2x128xbf16>
    %204 = vector.shape_cast %203 : vector<1x1x1x2x128xbf16> to vector<2x128xbf16>
    %205 = arith.extf %204 : vector<2x128xbf16> to vector<2x128xf32>
    %206 = arith.mulf %201, %205 : vector<2x128xf32>
    %207 = arith.addf %178, %206 : vector<2x128xf32>
    %c0_174 = arith.constant 0 : index
    %c1_175 = arith.constant 1 : index
    %c3_176 = arith.constant 3 : index
    %c0_177 = arith.constant 0 : index
    %c0_178 = arith.constant 0 : index
    %208 = vector.load %arg2[%c0_174, %c1_175, %c3_176, %c0_177, %c0_178] : memref<1x3x4x2x128xbf16, #tpu.memory_space<vmem>>, vector<1x1x1x2x128xbf16>
    %209 = vector.shape_cast %208 : vector<1x1x1x2x128xbf16> to vector<2x128xbf16>
    %210 = arith.extf %209 : vector<2x128xbf16> to vector<2x128xf32>
    %211 = arith.mulf %201, %210 : vector<2x128xf32>
    %212 = arith.addf %183, %211 : vector<2x128xf32>
    %c0_179 = arith.constant 0 : index
    %c2_180 = arith.constant 2 : index
    %c3_181 = arith.constant 3 : index
    %c0_182 = arith.constant 0 : index
    %c0_183 = arith.constant 0 : index
    %213 = vector.load %arg2[%c0_179, %c2_180, %c3_181, %c0_182, %c0_183] : memref<1x3x4x2x128xbf16, #tpu.memory_space<vmem>>, vector<1x1x1x2x128xbf16>
    %214 = vector.shape_cast %213 : vector<1x1x1x2x128xbf16> to vector<2x128xbf16>
    %215 = arith.extf %214 : vector<2x128xbf16> to vector<2x128xf32>
    %216 = arith.mulf %201, %215 : vector<2x128xf32>
    %217 = arith.addf %188, %216 : vector<2x128xf32>
    %cst_184 = arith.constant 1.000000e+00 : f32
    %218 = vector.broadcast %cst_184 : f32 to vector<2x128xf32>
    %219 = arith.divf %218, %202 : vector<2x128xf32>
    %cst_185 = arith.constant 1.000000e+00 : f32
    %220 = vector.broadcast %cst_185 : f32 to vector<2x128xf32>
    %221 = arith.mulf %98, %220 : vector<2x128xf32>
    %222 = arith.addf %207, %221 : vector<2x128xf32>
    %223 = arith.mulf %222, %219 : vector<2x128xf32>
    %c0_186 = arith.constant 0 : index
    %c0_187 = arith.constant 0 : index
    %c0_188 = arith.constant 0 : index
    %c0_189 = arith.constant 0 : index
    %224 = vector.load %arg4[%c0_186, %c0_187, %c0_188, %c0_189] : memref<1x4x2x128xf32, #tpu.memory_space<vmem>>, vector<1x1x2x128xf32>
    %225 = vector.shape_cast %224 : vector<1x1x2x128xf32> to vector<2x128xf32>
    %226 = vector.shape_cast %223 : vector<2x128xf32> to vector<1x1x2x128xf32>
    tpu.vector_store %arg4[%c0_186, %c0_187, %c0_188, %c0_189], %226 {strides = array<i32>} : memref<1x4x2x128xf32, #tpu.memory_space<vmem>>, vector<1x1x2x128xf32>,
    %cst_190 = arith.constant 1.000000e+00 : f32
    %227 = vector.broadcast %cst_190 : f32 to vector<2x128xf32>
    %228 = arith.mulf %98, %227 : vector<2x128xf32>
    %229 = arith.addf %212, %228 : vector<2x128xf32>
    %230 = arith.mulf %229, %219 : vector<2x128xf32>
    %c0_191 = arith.constant 0 : index
    %c1_192 = arith.constant 1 : index
    %c0_193 = arith.constant 0 : index
    %c0_194 = arith.constant 0 : index
    %231 = vector.load %arg4[%c0_191, %c1_192, %c0_193, %c0_194] : memref<1x4x2x128xf32, #tpu.memory_space<vmem>>, vector<1x1x2x128xf32>
    %232 = vector.shape_cast %231 : vector<1x1x2x128xf32> to vector<2x128xf32>
    %233 = vector.shape_cast %230 : vector<2x128xf32> to vector<1x1x2x128xf32>
    tpu.vector_store %arg4[%c0_191, %c1_192, %c0_193, %c0_194], %233 {strides = array<i32>} : memref<1x4x2x128xf32, #tpu.memory_space<vmem>>, vector<1x1x2x128xf32>,
    %cst_195 = arith.constant 1.000000e+00 : f32
    %234 = vector.broadcast %cst_195 : f32 to vector<2x128xf32>
    %235 = arith.mulf %98, %234 : vector<2x128xf32>
    %236 = arith.addf %217, %235 : vector<2x128xf32>
    %237 = arith.mulf %236, %219 : vector<2x128xf32>
    %c0_196 = arith.constant 0 : index
    %c2_197 = arith.constant 2 : index
    %c0_198 = arith.constant 0 : index
    %c0_199 = arith.constant 0 : index
    %238 = vector.load %arg4[%c0_196, %c2_197, %c0_198, %c0_199] : memref<1x4x2x128xf32, #tpu.memory_space<vmem>>, vector<1x1x2x128xf32>
    %239 = vector.shape_cast %238 : vector<1x1x2x128xf32> to vector<2x128xf32>
    %240 = vector.shape_cast %237 : vector<2x128xf32> to vector<1x1x2x128xf32>
    tpu.vector_store %arg4[%c0_196, %c2_197, %c0_198, %c0_199], %240 {strides = array<i32>} : memref<1x4x2x128xf32, #tpu.memory_space<vmem>>, vector<1x1x2x128xf32>,
    %cst_200 = arith.constant 1.000000e+00 : f32
    %241 = vector.broadcast %cst_200 : f32 to vector<2x128xf32>
    %242 = arith.subf %241, %82 : vector<2x128xf32>
    %c0_201 = arith.constant 0 : index
    %c3_202 = arith.constant 3 : index
    %c0_203 = arith.constant 0 : index
    %c0_204 = arith.constant 0 : index
    %243 = vector.load %arg4[%c0_201, %c3_202, %c0_203, %c0_204] : memref<1x4x2x128xf32, #tpu.memory_space<vmem>>, vector<1x1x2x128xf32>
    %244 = vector.shape_cast %243 : vector<1x1x2x128xf32> to vector<2x128xf32>
    %245 = vector.shape_cast %242 : vector<2x128xf32> to vector<1x1x2x128xf32>
    tpu.vector_store %arg4[%c0_201, %c3_202, %c0_203, %c0_204], %245 {strides = array<i32>} : memref<1x4x2x128xf32, #tpu.memory_space<vmem>>, vector<1x1x2x128xf32>,
    return
  }
  func.func @transform_0(%arg0: i32, %arg1: i32) -> (i32, i32, i32, i32, i32) {
    %c0_i32 = arith.constant 0 : i32
    %c0_i32_0 = arith.constant 0 : i32
    %c0_i32_1 = arith.constant 0 : i32
    %c0_i32_2 = arith.constant 0 : i32
    return %arg0, %c0_i32, %c0_i32_0, %arg1, %c0_i32_1 : i32, i32, i32, i32, i32
  }
  func.func @transform_1(%arg0: i32, %arg1: i32) -> (i32, i32, i32, i32, i32) {
    %c0_i32 = arith.constant 0 : i32
    %c0_i32_0 = arith.constant 0 : i32
    %c0_i32_1 = arith.constant 0 : i32
    %c0_i32_2 = arith.constant 0 : i32
    return %arg0, %c0_i32, %c0_i32_0, %arg1, %c0_i32_1 : i32, i32, i32, i32, i32
  }
  func.func @transform_2(%arg0: i32, %arg1: i32) -> (i32, i32, i32, i32) {
    %c0_i32 = arith.constant 0 : i32
    %c0_i32_0 = arith.constant 0 : i32
    %c0_i32_1 = arith.constant 0 : i32
    return %arg0, %c0_i32, %arg1, %c0_i32_0 : i32, i32, i32, i32
  }
}

</mosaic_0001>

<llo_original>
// kernel: soft_phong_shader_plus_blend.1
$region0: #{soft_phong_shader_plus_blend.1}
  #allocation0 [shape = 'u32[]', space=smem, size = 0x4, offset = 0x4, fixed_abs, tag = 'smem constant byte address 0x4 - core index']
  #allocation1 [shape = 'u32[72,128]{1,0:T(1,128)}', space=vmem, size = 0x9000, scoped, tag = 'internal scratch']
  #allocation2 [shape = 'f32[4,2,128]{2,1,0:T(2,128)}', space=vmem, size = 0x1000, scoped, tag = 'scratch operand']
  %s0 = inlined_call_operand.vmem [shape: bf16[2,3,4,2,128], index: 0, kind: input, shape index: {}]
  %s1 = inlined_call_operand.vmem [shape: f32[2,2,4,2,128], index: 1, kind: input, shape index: {}]
  %s2 = inlined_call_operand.vmem [shape: f32[2,4,2,128], index: 2, kind: output, shape index: {}]
  %s3 = sld [smem:[#allocation0]]
  $region41: #{soft_phong_shader_plus_blend.1} parent=0
    _
  %s5 = ssub.s32 1, %s3
  %s6 = scalar_select 0, %s5, %s3
  loop: start=0, step=1, limit=4
  $region2: #{soft_phong_shader_plus_blend.1} parent=0 // loop_pre_header
    _
  $region3: #{soft_phong_shader_plus_blend.1} parent=0 // loop_header
    %s8 = sphi 0, %s12
    %p9 = scmp.ge.s32.totalorder %s8, 4
    %s15 = sphi 0, %s27
    %s16 = sphi 0, %s23
    %s17 = sphi 0, %s15
    %s18 = sphi 0, %s16
    %s19 = sphi 0, %s17
    %s20 = sphi 0, %s18
    %s32 = sphi 0, %s34
    %s35 = sphi 0, %s32
    %s36 = sphi 0, %s35
    %s52 = sphi 0, %s36
    %s60 = sphi 0, %s62
    %s63 = sphi 0, %s60
    %s64 = sphi 0, %s63
    %s80 = sphi 0, %s64
    %s88 = sphi 0, %s90
    %s91 = sphi 0, %s88
    %s92 = sphi 0, %s91
    %s108 = sphi 0, %s92
  $region4: #{soft_phong_shader_plus_blend.1} parent=0 // loop_header_branch
    %11 = sbr.rel (%p9) target = $region8
  $region5: #{soft_phong_shader_plus_blend.1} parent=0 // loop_body
    %s13 = ssub.s32 %s8, 1
    %s14 = ssub.s32 %s8, 2
    %s21 = sadd.s32 1, %s16
    %p22 = scmp.ge.s32.totalorder %s21, 1
    %s23 = scalar_select %p22, 0, %s21
    %s24 = sadd.s32 1, %s15
    %s25 = scalar_select %p22, %s24, %s15
    %p26 = scmp.ge.s32.totalorder %s25, 2
    %s27 = scalar_select %p26, 0, %s25
    %s28 = ssub.s32 %s15, %s27
    %s29 = ssub.s32 %s16, %s23
    %s30 = sor.u32 %s28, %s29
    %p31 = scmp.eq.s32.totalorder %s30, 0
    %s33 = sadd.s32 %s32, 1
    %s34 = scalar_select %p31, %s32, %s33
    %p37 = pneg %p31
    %p38 = scmp.eq.s32.totalorder %s8, 1
    %p39 = por %p37, %p38
    %p40 = scmp.ne.s32.totalorder %s32, %s35
    %p41 = scmp.eq.s32.totalorder %s8, 0
    %p42 = por %p40, %p41
    %p43 = scmp.ne.s32.totalorder %s32, %s35
    %p44 = scmp.eq.s32.totalorder %s13, 1
    %p45 = por %p43, %p44
    %p46 = scmp.ne.s32.totalorder %s35, %s36
    %p47 = scmp.eq.s32.totalorder %s13, 0
    %p48 = por %p46, %p47
    %p49 = scmp.ne.s32.totalorder %s35, %s36
    %p50 = scmp.eq.s32.totalorder %s14, 1
    %p51 = por %p49, %p50
    %p53 = scmp.ne.s32.totalorder %s36, %s52
    %p54 = scmp.eq.s32.totalorder %s14, 0
    %p55 = por %p53, %p54
    %s56 = ssub.s32 %s15, %s27
    %s57 = ssub.s32 %s16, %s23
    %s58 = sor.u32 %s56, %s57
    %p59 = scmp.eq.s32.totalorder %s58, 0
    %s61 = sadd.s32 %s60, 1
    %s62 = scalar_select %p59, %s60, %s61
    %p65 = pneg %p59
    %p66 = scmp.eq.s32.totalorder %s8, 1
    %p67 = por %p65, %p66
    %p68 = scmp.ne.s32.totalorder %s60, %s63
    %p69 = scmp.eq.s32.totalorder %s8, 0
    %p70 = por %p68, %p69
    %p71 = scmp.ne.s32.totalorder %s60, %s63
    %p72 = scmp.eq.s32.totalorder %s13, 1
    %p73 = por %p71, %p72
    %p74 = scmp.ne.s32.totalorder %s63, %s64
    %p75 = scmp.eq.s32.totalorder %s13, 0
    %p76 = por %p74, %p75
    %p77 = scmp.ne.s32.totalorder %s63, %s64
    %p78 = scmp.eq.s32.totalorder %s14, 1
    %p79 = por %p77, %p78
    %p81 = scmp.ne.s32.totalorder %s64, %s80
    %p82 = scmp.eq.s32.totalorder %s14, 0
    %p83 = por %p81, %p82
    %s84 = ssub.s32 %s15, %s27
    %s85 = ssub.s32 %s16, %s23
    %s86 = sor.u32 %s84, %s85
    %p87 = scmp.eq.s32.totalorder %s86, 0
    %s89 = sadd.s32 %s88, 1
    %s90 = scalar_select %p87, %s88, %s89
    %p93 = pneg %p87
    %p94 = scmp.eq.s32.totalorder %s8, 1
    %p95 = por %p93, %p94
    %p96 = scmp.ne.s32.totalorder %s88, %s91
    %p97 = scmp.eq.s32.totalorder %s8, 0
    %p98 = por %p96, %p97
    %p99 = scmp.ne.s32.totalorder %s88, %s91
    %p100 = scmp.eq.s32.totalorder %s13, 1
    %p101 = por %p99, %p100
    %p102 = scmp.ne.s32.totalorder %s91, %s92
    %p103 = scmp.eq.s32.totalorder %s13, 0
    %p104 = por %p102, %p103
    %p105 = scmp.ne.s32.totalorder %s91, %s92
    %p106 = scmp.eq.s32.totalorder %s14, 1
    %p107 = por %p105, %p106
    %p109 = scmp.ne.s32.totalorder %s92, %s108
    %p110 = scmp.eq.s32.totalorder %s14, 0
    %p111 = por %p109, %p110
    %p112 = scmp.le.s32.totalorder 1, %s8
    %p113 = scmp.lt.s32.totalorder %s8, 3
    %p114 = pnand %p112, %p113
    %p115 = pneg %p114
    // Predicated region
    $region9: #{soft_phong_shader_plus_blend.1} parent=5 // pred_check
      _
    $region10: #{soft_phong_shader_plus_blend.1} parent=5 // pred_check_branch
      %117 = sbr.rel (%p114) target = $region12
    $region11: #{soft_phong_shader_plus_blend.1} parent=5 // pred_region
      %s118 = ssub.s32 %s8, 1
    $region12: #{soft_phong_shader_plus_blend.1} parent=5 // pred_fallthru
      _
    %p119 = scmp.lt.s32.totalorder %s8, 2
    // Predicated region
    $region13: #{soft_phong_shader_plus_blend.1} parent=5 // pred_check
      %p120 = pneg %p119
    $region14: #{soft_phong_shader_plus_blend.1} parent=5 // pred_check_branch
      %122 = sbr.rel (%p120) target = $region16
    $region15: #{soft_phong_shader_plus_blend.1} parent=5 // pred_region
      // Predicated region
      $region17: #{soft_phong_shader_plus_blend.1} parent=15 // pred_check
        %p123 = pneg %p42
      $region18: #{soft_phong_shader_plus_blend.1} parent=15 // pred_check_branch
        %125 = sbr.rel (%p123) target = $region20
      $region19: #{soft_phong_shader_plus_blend.1} parent=15 // pred_region
        %p126 = scmp.lt.s32.totalorder %s15, 1
        %s127 = scalar_select %p126, %s15, 1
        %p128 = scmp.lt.s32.totalorder %s16, 0
        %s129 = scalar_select %p128, %s16, 0
        %s130 = smul.addr %s127, 12
        %s131 = sadd.s32 %s129, %s130
        %s132 = scalar_lea.vmem %s0, %s131
      $region20: #{soft_phong_shader_plus_blend.1} parent=15 // pred_fallthru
        _
      // Predicated region
      $region21: #{soft_phong_shader_plus_blend.1} parent=15 // pred_check
        %p133 = pneg %p70
      $region22: #{soft_phong_shader_plus_blend.1} parent=15 // pred_check_branch
        %135 = sbr.rel (%p133) target = $region24
      $region23: #{soft_phong_shader_plus_blend.1} parent=15 // pred_region
        %p136 = scmp.lt.s32.totalorder %s15, 1
        %s137 = scalar_select %p136, %s15, 1
        %p138 = scmp.lt.s32.totalorder %s16, 0
        %s139 = scalar_select %p138, %s16, 0
        %s140 = smul.addr %s137, 8
        %s141 = sadd.s32 %s139, %s140
        %s142 = smul.addr %s141, 2
        %s143 = scalar_lea.vmem %s1, %s142
      $region24: #{soft_phong_shader_plus_blend.1} parent=15 // pred_fallthru
        _
    $region16: #{soft_phong_shader_plus_blend.1} parent=5 // pred_fallthru
      _
    %p144 = scmp.le.s32.totalorder 1, %s8
    %p145 = scmp.lt.s32.totalorder %s8, 3
    %p146 = pnand %p144, %p145
    %p147 = pneg %p146
    // Predicated region
    $region25: #{soft_phong_shader_plus_blend.1} parent=5 // pred_check
      _
    $region26: #{soft_phong_shader_plus_blend.1} parent=5 // pred_check_branch
      %149 = sbr.rel (%p146) target = $region28
    $region27: #{soft_phong_shader_plus_blend.1} parent=5 // pred_region
      %s150 = ssub.s32 %s8, 1
      %p151 = scmp.lt.s32.totalorder %s17, 1
      %s152 = scalar_select %p151, %s17, 1
      %p153 = scmp.lt.s32.totalorder %s18, 0
      %s154 = scalar_select %p153, %s18, 0
      %s155 = smul.addr %s152, 12
      %s156 = sadd.s32 %s154, %s155
      %s157 = scalar_lea.vmem %s0, %s156
      %p158 = pneg %p48
      %p159 = pneg %p45
      %p160 = scmp.lt.s32.totalorder %s17, 1
      %s161 = scalar_select %p160, %s17, 1
      %p162 = scmp.lt.s32.totalorder %s18, 0
      %s163 = scalar_select %p162, %s18, 0
      %s164 = smul.addr %s161, 8
      %s165 = sadd.s32 %s163, %s164
      %s166 = smul.addr %s165, 2
      %s167 = scalar_lea.vmem %s1, %s166
      %p168 = pneg %p76
      %p169 = pneg %p73
      %p170 = pneg %p104
      %p171 = pneg %p101
      %p172 = scmp.lt.s32.totalorder %s17, 1
      %s173 = scalar_select %p172, %s17, 1
      %p174 = scmp.lt.s32.totalorder %s18, 0
      %s175 = scalar_select %p174, %s18, 0
      %s176 = smul.addr %s173, 4
      %s177 = sadd.s32 %s175, %s176
      %s178 = smul.addr %s177, 2
      %s179 = scalar_lea.vmem %s2, %s178
      %p180 = scmp.lt.s32.totalorder %s17, 1
      %s181 = scalar_select %p180, %s17, 1
      %p182 = scmp.lt.s32.totalorder %s18, 0
      %s183 = scalar_select %p182, %s18, 0
      %s184 = smul.addr %s181, 12
      %s185 = sadd.s32 %s183, %s184
      %s186 = scalar_lea.vmem %s0, %s185
      %p187 = scmp.lt.s32.totalorder %s17, 1
      %s188 = scalar_select %p187, %s17, 1
      %p189 = scmp.lt.s32.totalorder %s18, 0
      %s190 = scalar_select %p189, %s18, 0
      %s191 = smul.addr %s188, 8
      %s192 = sadd.s32 %s190, %s191
      %s193 = smul.addr %s192, 2
      %s194 = scalar_lea.vmem %s1, %s193
      %p195 = scmp.lt.s32.totalorder %s17, 1
      %s196 = scalar_select %p195, %s17, 1
      %p197 = scmp.lt.s32.totalorder %s18, 0
      %s198 = scalar_select %p197, %s18, 0
      %s199 = smul.addr %s196, 4
      %s200 = sadd.s32 %s198, %s199
      %s201 = smul.addr %s200, 2
      %s202 = scalar_lea.vmem %s2, %s201
      %v203 = vld [vmem:[%s194] sm:$0x3]
      %v204 = vmul.f32 %v203, 100.0
      %v205 = vmul.f32 %v204, 1.442695
      %v206 = vpow.pop %v205
      %v207 = vadd.f32 %v206, 1.0
      %v208 = vrcp.pop %v207
      %v209 = vmul.f32 %v207, %v208
      %v210 = vsub.f32 1.0, %v209
      %v211 = vmul.f32 %v208, %v210
      %v212 = vadd.f32 %v208, %v211
      %vm213 = vweird.f32 %v207
      %vm214 = vweird.f32 %v208
      %vm215 = vmor %vm213, %vm214
      %v216 = vsel %vm215, %v208, %v212
      %v217 = vand.u32 2147483647, %v207
      %vm218 = vcmp.eq.f32.partialorder %v217, 8.507059e+37
      %v219 = vand.u32 %v207, 2147483648
      %v220 = vor.u32 1.1754944e-38, %v219
      %v221 = vsel %vm218, %v220, %v216
      %v222 = vmul.f32 1.0, %v221
      %223 = vst [vmem:[#allocation2] sm:$0x3] %v222
      %v224 = vsub.f32 1.0, %v222
      %s225 = scalar_lea.vmem %s194, 8
      %v226 = vld [vmem:[%s225] sm:$0x3]
      %v227 = vsub.f32 100.0, %v226
      %v228 = vmul.f32 %v227, 0.01010101
      %v229 = vmax.f32 %v228, 0.0
      %s230 = scalar_lea.vmem %s194, 2
      %v231 = vld [vmem:[%s230] sm:$0x3]
      %v232 = vmul.f32 %v231, 100.0
      %v233 = vmul.f32 %v232, 1.442695
      %v234 = vpow.pop %v233
      %v235 = vadd.f32 %v234, 1.0
      %v236 = vrcp.pop %v235
      %v237 = vmul.f32 %v235, %v236
      %v238 = vsub.f32 1.0, %v237
      %v239 = vmul.f32 %v236, %v238
      %v240 = vadd.f32 %v236, %v239
      %vm241 = vweird.f32 %v235
      %vm242 = vweird.f32 %v236
      %vm243 = vmor %vm241, %vm242
      %v244 = vsel %vm243, %v236, %v240
      %v245 = vand.u32 2147483647, %v235
      %vm246 = vcmp.eq.f32.partialorder %v245, 8.507059e+37
      %v247 = vand.u32 %v235, 2147483648
      %v248 = vor.u32 1.1754944e-38, %v247
      %v249 = vsel %vm246, %v248, %v244
      %v250 = vmul.f32 1.0, %v249
      %s251 = scalar_lea.vmem [#allocation2], 2
      %252 = vst [vmem:[%s251] sm:$0x3] %v250
      %v253 = vsub.f32 1.0, %v250
      %v254 = vmul.f32 %v224, %v253
      %s255 = scalar_lea.vmem %s194, 10
      %v256 = vld [vmem:[%s255] sm:$0x3]
      %v257 = vsub.f32 100.0, %v256
      %v258 = vmul.f32 %v257, 0.01010101
      %v259 = vmax.f32 %v229, %v258
      %s260 = scalar_lea.vmem %s194, 4
      %v261 = vld [vmem:[%s260] sm:$0x3]
      %v262 = vmul.f32 %v261, 100.0
      %v263 = vmul.f32 %v262, 1.442695
      %v264 = vpow.pop %v263
      %v265 = vadd.f32 %v264, 1.0
      %v266 = vrcp.pop %v265
      %v267 = vmul.f32 %v265, %v266
      %v268 = vsub.f32 1.0, %v267
      %v269 = vmul.f32 %v266, %v268
      %v270 = vadd.f32 %v266, %v269
      %vm271 = vweird.f32 %v265
      %vm272 = vweird.f32 %v266
      %vm273 = vmor %vm271, %vm272
      %v274 = vsel %vm273, %v266, %v270
      %v275 = vand.u32 2147483647, %v265
      %vm276 = vcmp.eq.f32.partialorder %v275, 8.507059e+37
      %v277 = vand.u32 %v265, 2147483648
      %v278 = vor.u32 1.1754944e-38, %v277
      %v279 = vsel %vm276, %v278, %v274
      %v280 = vmul.f32 1.0, %v279
      %s281 = scalar_lea.vmem [#allocation2], 4
      %282 = vst [vmem:[%s281] sm:$0x3] %v280
      %v283 = vsub.f32 1.0, %v280
      %v284 = vmul.f32 %v254, %v283
      %s285 = scalar_lea.vmem %s194, 12
      %v286 = vld [vmem:[%s285] sm:$0x3]
      %v287 = vsub.f32 100.0, %v286
      %v288 = vmul.f32 %v287, 0.01010101
      %v289 = vmax.f32 %v259, %v288
      %s290 = scalar_lea.vmem %s194, 6
      %v291 = vld [vmem:[%s290] sm:$0x3]
      %v292 = vmul.f32 %v291, 100.0
      %v293 = vmul.f32 %v292, 1.442695
      %v294 = vpow.pop %v293
      %v295 = vadd.f32 %v294, 1.0
      %v296 = vrcp.pop %v295
      %v297 = vmul.f32 %v295, %v296
      %v298 = vsub.f32 1.0, %v297
      %v299 = vmul.f32 %v296, %v298
      %v300 = vadd.f32 %v296, %v299
      %vm301 = vweird.f32 %v295
      %vm302 = vweird.f32 %v296
      %vm303 = vmor %vm301, %vm302
      %v304 = vsel %vm303, %v296, %v300
      %v305 = vand.u32 2147483647, %v295
      %vm306 = vcmp.eq.f32.partialorder %v305, 8.507059e+37
      %v307 = vand.u32 %v295, 2147483648
      %v308 = vor.u32 1.1754944e-38, %v307
      %v309 = vsel %vm306, %v308, %v304
      %v310 = vmul.f32 1.0, %v309
      %s311 = scalar_lea.vmem [#allocation2], 6
      %312 = vst [vmem:[%s311] sm:$0x3] %v310
      %v313 = vsub.f32 1.0, %v310
      %v314 = vmul.f32 %v284, %v313
      %s315 = scalar_lea.vmem %s194, 14
      %v316 = vld [vmem:[%s315] sm:$0x3]
      %v317 = vsub.f32 100.0, %v316
      %v318 = vmul.f32 %v317, 0.01010101
      %v319 = vmax.f32 %v289, %v318
      %v320 = vmax.f32 %v319, 1e-07
      %v321 = vsub.f32 1e-10, %v320
      %v322 = vmul.f32 %v321, 100.0
      %v323 = vmul.f32 %v322, 1.442695
      %v324 = vpow.pop %v323
      %v325 = vmax.f32 %v324, 1e-07
      %v326 = vld [vmem:[%s225] sm:$0x3]
      %v327 = vsub.f32 100.0, %v326
      %v328 = vmul.f32 %v327, 0.01010101
      %v329 = vld [vmem:[#allocation2] sm:$0x3]
      %v330 = vsub.f32 %v328, %v320
      %v331 = vmul.f32 %v330, 100.0
      %v332 = vmul.f32 %v331, 1.442695
      %v333 = vpow.pop %v332
      %v334 = vmul.f32 %v329, %v333
      %v335 = vadd.f32 %v325, %v334
      %v336 = vld [vmem:[%s186] sm:$0x1]
      %v337 = vunpack.c.l.bf16 %v336
      %v338 = vmul.f32 %v334, %v337
      %v339 = vadd.f32 %v338, 0.0
      %s340 = scalar_lea.vmem %s186, 4
      %v341 = vld [vmem:[%s340] sm:$0x1]
      %v342 = vunpack.c.l.bf16 %v341
      %v343 = vmul.f32 %v334, %v342
      %v344 = vadd.f32 %v343, 0.0
      %s345 = scalar_lea.vmem %s186, 8
      %v346 = vld [vmem:[%s345] sm:$0x1]
      %v347 = vunpack.c.l.bf16 %v346
      %v348 = vmul.f32 %v334, %v347
      %v349 = vadd.f32 %v348, 0.0
      %v350 = vld [vmem:[%s255] sm:$0x3]
      %v351 = vsub.f32 100.0, %v350
      %v352 = vmul.f32 %v351, 0.01010101
      %v353 = vld [vmem:[%s251] sm:$0x3]
      %v354 = vsub.f32 %v352, %v320
      %v355 = vmul.f32 %v354, 100.0
      %v356 = vmul.f32 %v355, 1.442695
      %v357 = vpow.pop %v356
      %v358 = vmul.f32 %v353, %v357
      %v359 = vadd.f32 %v335, %v358
      %s360 = scalar_lea.vmem %s186, 1
      %v361 = vld [vmem:[%s360] sm:$0x1]
      %v362 = vunpack.c.l.bf16 %v361
      %v363 = vmul.f32 %v358, %v362
      %v364 = vadd.f32 %v339, %v363
      %s365 = scalar_lea.vmem %s186, 5
      %v366 = vld [vmem:[%s365] sm:$0x1]
      %v367 = vunpack.c.l.bf16 %v366
      %v368 = vmul.f32 %v358, %v367
      %v369 = vadd.f32 %v344, %v368
      %s370 = scalar_lea.vmem %s186, 9
      %v371 = vld [vmem:[%s370] sm:$0x1]
      %v372 = vunpack.c.l.bf16 %v371
      %v373 = vmul.f32 %v358, %v372
      %v374 = vadd.f32 %v349, %v373
      %v375 = vld [vmem:[%s285] sm:$0x3]
      %v376 = vsub.f32 100.0, %v375
      %v377 = vmul.f32 %v376, 0.01010101
      %v378 = vld [vmem:[%s281] sm:$0x3]
      %v379 = vsub.f32 %v377, %v320
      %v380 = vmul.f32 %v379, 100.0
      %v381 = vmul.f32 %v380, 1.442695
      %v382 = vpow.pop %v381
      %v383 = vmul.f32 %v378, %v382
      %v384 = vadd.f32 %v359, %v383
      %s385 = scalar_lea.vmem %s186, 2
      %v386 = vld [vmem:[%s385] sm:$0x1]
      %v387 = vunpack.c.l.bf16 %v386
      %v388 = vmul.f32 %v383, %v387
      %v389 = vadd.f32 %v364, %v388
      %s390 = scalar_lea.vmem %s186, 6
      %v391 = vld [vmem:[%s390] sm:$0x1]
      %v392 = vunpack.c.l.bf16 %v391
      %v393 = vmul.f32 %v383, %v392
      %v394 = vadd.f32 %v369, %v393
      %s395 = scalar_lea.vmem %s186, 10
      %v396 = vld [vmem:[%s395] sm:$0x1]
      %v397 = vunpack.c.l.bf16 %v396
      %v398 = vmul.f32 %v383, %v397
      %v399 = vadd.f32 %v374, %v398
      %v400 = vld [vmem:[%s311] sm:$0x3]
      %v401 = vsub.f32 %v318, %v320
      %v402 = vmul.f32 %v401, 100.0
      %v403 = vmul.f32 %v402, 1.442695
      %v404 = vpow.pop %v403
      %v405 = vmul.f32 %v400, %v404
      %v406 = vadd.f32 %v384, %v405
      %s407 = scalar_lea.vmem %s186, 3
      %v408 = vld [vmem:[%s407] sm:$0x1]
      %v409 = vunpack.c.l.bf16 %v408
      %v410 = vmul.f32 %v405, %v409
      %v411 = vadd.f32 %v389, %v410
      %s412 = scalar_lea.vmem %s186, 7
      %v413 = vld [vmem:[%s412] sm:$0x1]
      %v414 = vunpack.c.l.bf16 %v413
      %v415 = vmul.f32 %v405, %v414
      %v416 = vadd.f32 %v394, %v415
      %s417 = scalar_lea.vmem %s186, 11
      %v418 = vld [vmem:[%s417] sm:$0x1]
      %v419 = vunpack.c.l.bf16 %v418
      %v420 = vmul.f32 %v405, %v419
      %v421 = vadd.f32 %v399, %v420
      %v422 = vrcp.pop %v406
      %v423 = vmul.f32 %v406, %v422
      %v424 = vsub.f32 1.0, %v423
      %v425 = vmul.f32 %v422, %v424
      %v426 = vadd.f32 %v422, %v425
      %vm427 = vweird.f32 %v406
      %vm428 = vweird.f32 %v422
      %vm429 = vmor %vm427, %vm428
      %v430 = vsel %vm429, %v422, %v426
      %v431 = vand.u32 2147483647, %v406
      %vm432 = vcmp.eq.f32.partialorder %v431, 8.507059e+37
      %v433 = vand.u32 %v406, 2147483648
      %v434 = vor.u32 1.1754944e-38, %v433
      %v435 = vsel %vm432, %v434, %v430
      %v436 = vmul.f32 1.0, %v435
      %v437 = vadd.f32 %v411, %v325
      %v438 = vmul.f32 %v437, %v436
      %439 = vst [vmem:[%s202] sm:$0x3] %v438
      %v440 = vadd.f32 %v416, %v325
      %v441 = vmul.f32 %v440, %v436
      %s442 = scalar_lea.vmem %s202, 2
      %443 = vst [vmem:[%s442] sm:$0x3] %v441
      %v444 = vadd.f32 %v421, %v325
      %v445 = vmul.f32 %v444, %v436
      %s446 = scalar_lea.vmem %s202, 4
      %447 = vst [vmem:[%s446] sm:$0x3] %v445
      %v448 = vsub.f32 1.0, %v314
      %s449 = scalar_lea.vmem %s202, 6
      %450 = vst [vmem:[%s449] sm:$0x3] %v448
      %p451 = scmp.lt.s32.totalorder %s17, 1
      %s452 = scalar_select %p451, %s17, 1
      %p453 = scmp.lt.s32.totalorder %s18, 0
      %s454 = scalar_select %p453, %s18, 0
      %s455 = smul.addr %s452, 4
      %s456 = sadd.s32 %s454, %s455
      %s457 = smul.addr %s456, 2
      %s458 = scalar_lea.vmem %s2, %s457
      // Predicated region
      $region29: #{soft_phong_shader_plus_blend.1} parent=27 // pred_check
        %p459 = pneg %p101
      $region30: #{soft_phong_shader_plus_blend.1} parent=27 // pred_check_branch
        %461 = sbr.rel (%p459) target = $region32
      $region31: #{soft_phong_shader_plus_blend.1} parent=27 // pred_region
        _
      $region32: #{soft_phong_shader_plus_blend.1} parent=27 // pred_fallthru
        _
    $region28: #{soft_phong_shader_plus_blend.1} parent=5 // pred_fallthru
      _
    %p462 = scmp.le.s32.totalorder 2, %s8
    // Predicated region
    $region33: #{soft_phong_shader_plus_blend.1} parent=5 // pred_check
      %p463 = pneg %p462
    $region34: #{soft_phong_shader_plus_blend.1} parent=5 // pred_check_branch
      %465 = sbr.rel (%p463) target = $region36
    $region35: #{soft_phong_shader_plus_blend.1} parent=5 // pred_region
      %s466 = ssub.s32 %s8, 2
      // Predicated region
      $region37: #{soft_phong_shader_plus_blend.1} parent=35 // pred_check
        %p467 = pneg %p107
      $region38: #{soft_phong_shader_plus_blend.1} parent=35 // pred_check_branch
        %469 = sbr.rel (%p467) target = $region40
      $region39: #{soft_phong_shader_plus_blend.1} parent=35 // pred_region
        %p470 = scmp.lt.s32.totalorder %s19, 1
        %s471 = scalar_select %p470, %s19, 1
        %p472 = scmp.lt.s32.totalorder %s20, 0
        %s473 = scalar_select %p472, %s20, 0
        %s474 = smul.addr %s471, 4
        %s475 = sadd.s32 %s473, %s474
        %s476 = smul.addr %s475, 2
        %s477 = scalar_lea.vmem %s2, %s476
      $region40: #{soft_phong_shader_plus_blend.1} parent=35 // pred_fallthru
        _
    $region36: #{soft_phong_shader_plus_blend.1} parent=5 // pred_fallthru
      _
  $region6: #{soft_phong_shader_plus_blend.1} parent=0 // loop_footer
    %s12 = sadd.s32 1, %s8
  $region7: #{soft_phong_shader_plus_blend.1} parent=0 // loop_footer_branch
    %7 = sbr.rel target = $region3
  $region8: #{soft_phong_shader_plus_blend.1} parent=0 // loop_exit
    _

</llo_original>
